<compile_context>
chip_gen: v6e
topology: v6e:2x2x1
jax: 0.10.0
libtpu: 0.0.40
codegen_flags: <defaults>
</compile_context>

<pallas_src>
import jax
import jax.numpy as jnp
from jax.experimental import pallas as pl
from jax.experimental.pallas import tpu as pltpu


def _round_up(v, m):
    return ((v + m - 1) // m) * m


def _tpu_vmem_and_cores():
    """Trace-time hardware query: per-core VMEM bytes + TensorCores per chip."""
    vmem = 64 * 1024 * 1024                      # conservative default (v7x)
    try:
        info = pltpu.get_tpu_info()
        for name in ("vmem_capacity_bytes", "vmem_size_bytes", "vmem_bytes"):
            v = getattr(info, name, None)
            if v:
                vmem = int(v)
                break
    except Exception:
        pass
    cores = 1
    try:
        kind = jax.devices()[0].device_kind.lower()
        # Multi-TensorCore chips (grid "parallel" axes shard across cores).
        if any(t in kind for t in ("v7", "v4", "v5p")):
            cores = 2
    except Exception:
        pass
    return vmem, cores


def _pick_b_tile(n, c_pad, l_pad, vmem_limit, cores, h_out_itemsize):
    """Largest divisor of n whose per-grid-step VMEM footprint fits the budget."""
    elem = c_pad * l_pad
    # Per-batch-element bytes: double-buffered pipelined blocks
    #   in: x(bf16)+h(bf16)+c(f32), out: h_t + c_t(f32);
    # plus xh scratch (2Cp bf16) and batched-conv temporaries (~4x f32).
    per_b = (2 * (2 + 2 + 4 + h_out_itemsize + 4) + 4 + 16) * elem
    # Grid-invariant bytes: fused weight (bf16, double-buffered) + per-iteration
    # matmul/gate temporaries (mix/sig/g/c_t ... f32) + slack.
    fixed = 2 * (8 * c_pad * c_pad * 2) + 64 * elem + (1 << 20)
    budget = int(max(vmem_limit - fixed, per_b) * 0.9)
    cap = max(1, budget // per_b)
    if cores > 1 and n >= cores:
        cap = min(cap, n // cores)               # >= one grid step per TensorCore
    cap = int(min(cap, n))
    bt = 1
    for d in range(1, cap + 1):
        if n % d == 0:
            bt = d
    return bt


def _dws_convlstm_kernel(x_ref, h_ref, c_ref, wd_ref, w_ref, b_ref,
                         h_out_ref, c_out_ref, xh_ref):
    B, Cp, Lp = x_ref.shape
    K = wd_ref.shape[0]
    pad = K // 2

    # ---- Depthwise conv over L (zero padded), vectorized over the tile ------
    h32 = h_ref[...].astype(jnp.float32)                       # (B, Cp, Lp)
    h2d = h32.reshape(B * Cp, Lp)                               # lane rolls in 2D
    lane = jax.lax.broadcasted_iota(jnp.int32, (B * Cp, Lp), 1)

    h_conv = wd_ref[pad].reshape(1, Cp, 1) * h32                # center tap
    for k in range(K):                                          # K is tiny (e.g. 3)
        if k == pad:
            continue
        s = k - pad                                             # want shifted[l] = h[l + s]
        rolled = pltpu.roll(h2d, shift=(-s) % Lp, axis=1)
        valid = (lane < (Lp - s)) if s > 0 else (lane >= (-s))  # zero-pad edges
        shifted = jnp.where(valid, rolled, 0.0).reshape(B, Cp, Lp)
        h_conv = h_conv + wd_ref[k].reshape(1, Cp, 1) * shifted
    # Depthwise bias is folded into b_ref in the wrapper (b_1x1 + W_h @ b_dws).

    # Stage the fused-matmul RHS [x ; h_conv] once for the whole tile (bf16).
    xh_ref[:, :Cp, :] = x_ref[...]
    xh_ref[:, Cp:, :] = h_conv.astype(jnp.bfloat16)

    w = w_ref[...]                                              # (4Cp, 2Cp) bf16
    bias = b_ref[...]                                           # (4Cp, 1)  f32

    def body(b, carry):
        mix = jnp.dot(w, xh_ref[b],
                      preferred_element_type=jnp.float32) + bias  # (4Cp, Lp)
        sig = jax.nn.sigmoid(mix[:3 * Cp])                      # f|i|o in one pass
        f = sig[:Cp]
        i = sig[Cp:2 * Cp]
        o = sig[2 * Cp:3 * Cp]
        g = jnp.tanh(mix[3 * Cp:])
        # TODO(synk): cell_update_dropout (default p=0.0) is eval-mode identity; no RNG.
        c_t = f * c_ref[b] + i * g
        h_out_ref[b] = (o * jnp.tanh(c_t)).astype(h_out_ref.dtype)
        c_out_ref[b] = c_t.astype(c_out_ref.dtype)
        return carry

    # Bounded live ranges: loop (not a B-way static unroll) over the tile.
    unroll = True if B <= 8 else (2 if B % 2 == 0 else 1)
    jax.lax.fori_loop(0, B, body, 0, unroll=unroll)


@jax.jit
def dws_conv_lstm_1d(x, h_tm1, c_tm1, w_dws, b_dws, w_1x1, b_1x1):
    """x, h_tm1, c_tm1: (N, C, L). w_dws: (C,1,K), b_dws: (C,),
    w_1x1: (4C,2C,1), b_1x1: (4C,). Returns (h_t, c_t): h_t in x.dtype, c_t in f32."""
    N, C, L = x.shape
    K = w_dws.shape[-1]

    # Pad C to a sublane multiple (8) and L to a lane multiple (128) so gate
    # slices are aligned and output stores are lane-dense; skipped when aligned.
    Cp = _round_up(C, 8)
    Lp = _round_up(L, 128)

    def prep(a, dtype):
        a = a.astype(dtype)          # bf16 transport for x/h (fuses with the pad)
        if Cp != C or Lp != L:
            a = jnp.pad(a, ((0, 0), (0, Cp - C), (0, Lp - L)))
        return a

    x_p = prep(x, jnp.bfloat16)
    h_p = prep(h_tm1, jnp.bfloat16)
    c_p = prep(c_tm1, jnp.float32)   # cell state stays f32 (recurrent precision)

    # Depthwise taps as (K, Cp, 1): static first-axis indexing in the kernel.
    wd = jnp.transpose(w_dws.astype(jnp.float32).reshape(C, K), (1, 0))   # (K, C)
    if Cp != C:
        wd = jnp.pad(wd, ((0, 0), (0, Cp - C)))
    wd = wd[:, :, None]

    # Fused 1x1: single (4Cp, 2Cp) bf16 weight over [x ; h_conv]; fold the
    # depthwise bias through W_h into the 1x1 bias (exact, done in f32).
    w11 = w_1x1[:, :, 0].astype(jnp.float32)                              # (4C, 2C)
    b_fused = b_1x1.astype(jnp.float32) + w11[:, C:] @ b_dws.astype(jnp.float32)
    wx4 = w11[:, :C].reshape(4, C, C)
    wh4 = w11[:, C:].reshape(4, C, C)
    b4 = b_fused.reshape(4, C)
    if Cp != C:
        wx4 = jnp.pad(wx4, ((0, 0), (0, Cp - C), (0, Cp - C)))
        wh4 = jnp.pad(wh4, ((0, 0), (0, Cp - C), (0, Cp - C)))
        b4 = jnp.pad(b4, ((0, 0), (0, Cp - C)))
    w_fused = jnp.concatenate([wx4, wh4], axis=-1).reshape(4 * Cp, 2 * Cp)
    w_fused = w_fused.astype(jnp.bfloat16)
    b_fused_p = b4.reshape(4 * Cp, 1)

    # Generation-aware VMEM budget + batch tile.
    vmem_cap, cores = _tpu_vmem_and_cores()
    vmem_limit = int(vmem_cap * 0.8)
    bt = _pick_b_tile(N, Cp, Lp, vmem_limit, cores, jnp.dtype(x.dtype).itemsize)
    grid = (N // bt,)

    per_batch = lambda n: (n, 0, 0)
    out_shape = (jax.ShapeDtypeStruct((N, Cp, Lp), x.dtype),      # h_t
                 jax.ShapeDtypeStruct((N, Cp, Lp), jnp.float32))  # c_t (always f32)

    grid_spec = pltpu.PrefetchScalarGridSpec(
        num_scalar_prefetch=0,
        grid=grid,
        in_specs=[
            pl.BlockSpec((bt, Cp, Lp), per_batch),                # x (bf16)
            pl.BlockSpec((bt, Cp, Lp), per_batch),                # h_tm1 (bf16)
            pl.BlockSpec((bt, Cp, Lp), per_batch),                # c_tm1 (f32)
            pl.BlockSpec((K, Cp, 1), lambda n: (0, 0, 0)),        # depthwise taps
            pl.BlockSpec((4 * Cp, 2 * Cp), lambda n: (0, 0)),     # fused 1x1 weight
            pl.BlockSpec((4 * Cp, 1), lambda n: (0, 0)),          # fused bias
        ],
        out_specs=[
            pl.BlockSpec((bt, Cp, Lp), per_batch),                # h_t
            pl.BlockSpec((bt, Cp, Lp), per_batch),                # c_t
        ],
        scratch_shapes=[pltpu.VMEM((bt, 2 * Cp, Lp), jnp.bfloat16)],  # staged [x;h_conv]
    )

    h_t, c_t = pl.pallas_call(
        _dws_convlstm_kernel,
        out_shape=out_shape,
        grid_spec=grid_spec,
        compiler_params=pltpu.CompilerParams(
            dimension_semantics=("parallel",),
            vmem_limit_bytes=vmem_limit),
    )(x_p, h_p, c_p, wd, w_fused, b_fused_p)

    if Cp != C or Lp != L:
        h_t = h_t[:, :C, :L]
        c_t = c_t[:, :C, :L]
    return h_t, c_t


def _reference(x, h, c, w_dws, b_dws, w_1x1, b_1x1):
    """Pure-JAX f32 reference matching the PyTorch forward (eval mode)."""
    N, C, L = x.shape
    K = w_dws.shape[-1]
    pad = K // 2
    hp = jnp.pad(h, ((0, 0), (0, 0), (pad, pad)))
    h_conv = sum(w_dws[None, :, 0, k, None] * hp[:, :, k:k + L] for k in range(K))
    h_conv = h_conv + b_dws[None, :, None]
    xh = jnp.concatenate([x, h_conv], axis=1)                    # (N, 2C, L)
    mix = jnp.einsum('oc,ncl->nol', w_1x1[:, :, 0], xh) + b_1x1[None, :, None]
    f = jax.nn.sigmoid(mix[:, :C])
    i = jax.nn.sigmoid(mix[:, C:2 * C])
    o = jax.nn.sigmoid(mix[:, 2 * C:3 * C])
    g = jnp.tanh(mix[:, 3 * C:])
    c_t = f * c + i * g
    h_t = o * jnp.tanh(c_t)
    return h_t, c_t


if __name__ == "__main__":
    N, C, L, K = 2, 32, 128, 3
    key = jax.random.PRNGKey(0)
    kx, kh, kc, k1, k2, k3, k4 = jax.random.split(key, 7)

    x = jax.random.normal(kx, (N, C, L), jnp.float32)
    h_tm1 = jax.random.normal(kh, (N, C, L), jnp.float32)
    c_tm1 = jax.random.normal(kc, (N, C, L), jnp.float32)

    # Parameters with PyTorch Conv1d shapes.
    w_dws = 0.2 * jax.random.normal(k1, (C, 1, K), jnp.float32)          # groups=C depthwise
    b_dws = 0.1 * jax.random.normal(k2, (C,), jnp.float32)
    w_1x1 = 0.1 * jax.random.normal(k3, (4 * C, 2 * C, 1), jnp.float32)  # pointwise
    b_1x1 = 0.1 * jax.random.normal(k4, (4 * C,), jnp.float32)

    h_t, c_t = dws_conv_lstm_1d(x, h_tm1, c_tm1, w_dws, b_dws, w_1x1, b_1x1)
    jax.block_until_ready((h_t, c_t))

    h_ref, c_ref = _reference(x, h_tm1, c_tm1, w_dws, b_dws, w_1x1, b_1x1)
    # Tolerance relaxed vs pure f32: x / h_tm1 are streamed bf16 and the fused
    # 1x1 matmul runs bf16 on the MXU (f32 accumulate); cell math stays f32.
    assert h_t.shape == h_ref.shape and c_t.shape == c_ref.shape
    assert jnp.allclose(h_t, h_ref, atol=3e-2, rtol=3e-2), "h_t mismatch"
    assert jnp.allclose(c_t, c_ref, atol=3e-2, rtol=3e-2), "c_t mismatch"

    print("KERNEL_OK")
</pallas_src>

<mosaic_0001>
module attributes {stable_mosaic.version = 11 : i64} {
  func.func @_dws_convlstm_kernel(%arg0: i32, %arg1: memref<2x32x128xbf16, #tpu.memory_space<vmem>>, %arg2: memref<2x32x128xbf16, #tpu.memory_space<vmem>>, %arg3: memref<2x32x128xf32, #tpu.memory_space<vmem>>, %arg4: memref<3x32x1xf32, #tpu.memory_space<vmem>>, %arg5: memref<128x64xbf16, #tpu.memory_space<vmem>>, %arg6: memref<128x1xf32, #tpu.memory_space<vmem>>, %arg7: memref<2x32x128xf32, #tpu.memory_space<vmem>>, %arg8: memref<2x32x128xf32, #tpu.memory_space<vmem>>, %arg9: memref<2x64x128xbf16, #tpu.memory_space<vmem>>) attributes {dimension_semantics = [#tpu.dimension_semantics<parallel>], iteration_bounds = array<i64: 1>, scalar_prefetch = 0 : i64, scratch_operands = 1 : i64, tpu.core_type = #tpu.core_type<tc>, window_params = [{transform_indices = @transform_0, window_bounds = array<i64: 2, 32, 128>}, {transform_indices = @transform_1, window_bounds = array<i64: 2, 32, 128>}, {transform_indices = @transform_2, window_bounds = array<i64: 2, 32, 128>}, {pipeline_mode = #tpu.pipeline_mode<synchronous>, transform_indices = @transform_3, window_bounds = array<i64: 3, 32, 1>}, {pipeline_mode = #tpu.pipeline_mode<synchronous>, transform_indices = @transform_4, window_bounds = array<i64: 128, 64>}, {pipeline_mode = #tpu.pipeline_mode<synchronous>, transform_indices = @transform_5, window_bounds = array<i64: 128, 1>}, {transform_indices = @transform_6, window_bounds = array<i64: 2, 32, 128>}, {transform_indices = @transform_7, window_bounds = array<i64: 2, 32, 128>}]} {
    %c0 = arith.constant 0 : index
    %c0_0 = arith.constant 0 : index
    %c0_1 = arith.constant 0 : index
    %0 = vector.load %arg2[%c0, %c0_0, %c0_1] : memref<2x32x128xbf16, #tpu.memory_space<vmem>>, vector<2x32x128xbf16>
    %1 = arith.extf %0 : vector<2x32x128xbf16> to vector<2x32x128xf32>
    %2 = vector.shape_cast %1 : vector<2x32x128xf32> to vector<64x128xf32>
    %3 = tpu.iota {dimensions = array<i32: 1>} : vector<64x128xi32>
    %c1 = arith.constant 1 : index
    %c0_2 = arith.constant 0 : index
    %c0_3 = arith.constant 0 : index
    %4 = vector.load %arg4[%c1, %c0_2, %c0_3] : memref<3x32x1xf32, #tpu.memory_space<vmem>>, vector<1x32x1xf32>
    %5 = vector.shape_cast %4 : vector<1x32x1xf32> to vector<32x1xf32>
    %6 = vector.shape_cast %5 : vector<32x1xf32> to vector<1x32x1xf32>
    %7 = vector.broadcast %6 : vector<1x32x1xf32> to vector<2x32x128xf32>
    %8 = arith.mulf %7, %1 : vector<2x32x128xf32>
    %c1_i32 = arith.constant 1 : i32
    %9 = tpu.dynamic_rotate %2 by %c1_i32 dim 1 : vector<64x128xf32>, i32 -> vector<64x128xf32>
    %c1_i32_4 = arith.constant 1 : i32
    %10 = vector.broadcast %c1_i32_4 : i32 to vector<64x128xi32>
    %11 = arith.cmpi sge, %3, %10 : vector<64x128xi32>
    %cst = arith.constant 0.000000e+00 : f32
    %12 = vector.broadcast %cst : f32 to vector<64x128xf32>
    %13 = arith.select %11, %9, %12 : vector<64x128xi1>, vector<64x128xf32>
    %14 = vector.shape_cast %13 : vector<64x128xf32> to vector<2x32x128xf32>
    %c0_5 = arith.constant 0 : index
    %c0_6 = arith.constant 0 : index
    %c0_7 = arith.constant 0 : index
    %15 = vector.load %arg4[%c0_5, %c0_6, %c0_7] : memref<3x32x1xf32, #tpu.memory_space<vmem>>, vector<1x32x1xf32>
    %16 = vector.shape_cast %15 : vector<1x32x1xf32> to vector<32x1xf32>
    %17 = vector.shape_cast %16 : vector<32x1xf32> to vector<1x32x1xf32>
    %18 = vector.broadcast %17 : vector<1x32x1xf32> to vector<2x32x128xf32>
    %19 = arith.mulf %18, %14 : vector<2x32x128xf32>
    %20 = arith.addf %8, %19 : vector<2x32x128xf32>
    %c127_i32 = arith.constant 127 : i32
    %21 = tpu.dynamic_rotate %2 by %c127_i32 dim 1 : vector<64x128xf32>, i32 -> vector<64x128xf32>
    %c127_i32_8 = arith.constant 127 : i32
    %22 = vector.broadcast %c127_i32_8 : i32 to vector<64x128xi32>
    %23 = arith.cmpi slt, %3, %22 : vector<64x128xi32>
    %cst_9 = arith.constant 0.000000e+00 : f32
    %24 = vector.broadcast %cst_9 : f32 to vector<64x128xf32>
    %25 = arith.select %23, %21, %24 : vector<64x128xi1>, vector<64x128xf32>
    %26 = vector.shape_cast %25 : vector<64x128xf32> to vector<2x32x128xf32>
    %c2 = arith.constant 2 : index
    %c0_10 = arith.constant 0 : index
    %c0_11 = arith.constant 0 : index
    %27 = vector.load %arg4[%c2, %c0_10, %c0_11] : memref<3x32x1xf32, #tpu.memory_space<vmem>>, vector<1x32x1xf32>
    %28 = vector.shape_cast %27 : vector<1x32x1xf32> to vector<32x1xf32>
    %29 = vector.shape_cast %28 : vector<32x1xf32> to vector<1x32x1xf32>
    %30 = vector.broadcast %29 : vector<1x32x1xf32> to vector<2x32x128xf32>
    %31 = arith.mulf %30, %26 : vector<2x32x128xf32>
    %32 = arith.addf %20, %31 : vector<2x32x128xf32>
    %c0_12 = arith.constant 0 : index
    %c0_13 = arith.constant 0 : index
    %c0_14 = arith.constant 0 : index
    %33 = vector.load %arg1[%c0_12, %c0_13, %c0_14] : memref<2x32x128xbf16, #tpu.memory_space<vmem>>, vector<2x32x128xbf16>
    %c0_15 = arith.constant 0 : index
    %c0_16 = arith.constant 0 : index
    %c0_17 = arith.constant 0 : index
    %34 = vector.load %arg9[%c0_15, %c0_16, %c0_17] : memref<2x64x128xbf16, #tpu.memory_space<vmem>>, vector<2x32x128xbf16>
    tpu.vector_store %arg9[%c0_15, %c0_16, %c0_17], %33 {strides = array<i32>} : memref<2x64x128xbf16, #tpu.memory_space<vmem>>, vector<2x32x128xbf16>,
    %35 = arith.truncf %32 : vector<2x32x128xf32> to vector<2x32x128xbf16>
    %c0_18 = arith.constant 0 : index
    %c32 = arith.constant 32 : index
    %c0_19 = arith.constant 0 : index
    %36 = vector.load %arg9[%c0_18, %c32, %c0_19] : memref<2x64x128xbf16, #tpu.memory_space<vmem>>, vector<2x32x128xbf16>
    tpu.vector_store %arg9[%c0_18, %c32, %c0_19], %35 {strides = array<i32>} : memref<2x64x128xbf16, #tpu.memory_space<vmem>>, vector<2x32x128xbf16>,
    %c0_20 = arith.constant 0 : index
    %c0_21 = arith.constant 0 : index
    %37 = vector.load %arg5[%c0_20, %c0_21] : memref<128x64xbf16, #tpu.memory_space<vmem>>, vector<128x64xbf16>
    %c0_22 = arith.constant 0 : index
    %c0_23 = arith.constant 0 : index
    %38 = vector.load %arg6[%c0_22, %c0_23] : memref<128x1xf32, #tpu.memory_space<vmem>>, vector<128x1xf32>
    %c0_i32 = arith.constant 0 : i32
    %39 = arith.index_cast %c0_i32 : i32 to index
    %c0_24 = arith.constant 0 : index
    %c0_25 = arith.constant 0 : index
    %40 = vector.load %arg9[%39, %c0_24, %c0_25] : memref<2x64x128xbf16, #tpu.memory_space<vmem>>, vector<1x64x128xbf16>
    %41 = vector.shape_cast %40 : vector<1x64x128xbf16> to vector<64x128xbf16>
    %cst_26 = arith.constant dense<0.000000e+00> : vector<128x128xf32>
    %42 = tpu.matmul %37, %41, %cst_26 {dimension_numbers = #tpu.dot_dimension_numbers<[1], [0], [0], [1], [0, 0, 1, 1], [], []>} : vector<128x64xbf16>, vector<64x128xbf16>, vector<128x128xf32> -> vector<128x128xf32>
    %43 = vector.broadcast %38 : vector<128x1xf32> to vector<128x128xf32>
    %44 = arith.addf %42, %43 : vector<128x128xf32>
    %45 = vector.extract_strided_slice %44 {offsets = [0, 0], sizes = [96, 128], strides = [1, 1]} : vector<128x128xf32> to vector<96x128xf32>
    %46 = arith.negf %45 : vector<96x128xf32>
    %47 = math.exp %46 : vector<96x128xf32>
    %cst_27 = arith.constant 1.000000e+00 : f32
    %48 = vector.broadcast %cst_27 : f32 to vector<96x128xf32>
    %49 = arith.addf %48, %47 : vector<96x128xf32>
    %50 = arith.divf %48, %49 : vector<96x128xf32>
    %51 = vector.extract_strided_slice %50 {offsets = [0, 0], sizes = [32, 128], strides = [1, 1]} : vector<96x128xf32> to vector<32x128xf32>
    %52 = vector.extract_strided_slice %50 {offsets = [32, 0], sizes = [32, 128], strides = [1, 1]} : vector<96x128xf32> to vector<32x128xf32>
    %53 = vector.extract_strided_slice %50 {offsets = [64, 0], sizes = [32, 128], strides = [1, 1]} : vector<96x128xf32> to vector<32x128xf32>
    %54 = vector.extract_strided_slice %44 {offsets = [96, 0], sizes = [32, 128], strides = [1, 1]} : vector<128x128xf32> to vector<32x128xf32>
    %55 = math.tanh %54 : vector<32x128xf32>
    %56 = arith.index_cast %c0_i32 : i32 to index
    %c0_28 = arith.constant 0 : index
    %c0_29 = arith.constant 0 : index
    %57 = vector.load %arg3[%56, %c0_28, %c0_29] : memref<2x32x128xf32, #tpu.memory_space<vmem>>, vector<1x32x128xf32>
    %58 = vector.shape_cast %57 : vector<1x32x128xf32> to vector<32x128xf32>
    %59 = arith.mulf %51, %58 : vector<32x128xf32>
    %60 = arith.mulf %52, %55 : vector<32x128xf32>
    %61 = arith.addf %59, %60 : vector<32x128xf32>
    %62 = math.tanh %61 : vector<32x128xf32>
    %63 = arith.mulf %53, %62 : vector<32x128xf32>
    %64 = arith.index_cast %c0_i32 : i32 to index
    %c0_30 = arith.constant 0 : index
    %c0_31 = arith.constant 0 : index
    %65 = vector.load %arg7[%64, %c0_30, %c0_31] : memref<2x32x128xf32, #tpu.memory_space<vmem>>, vector<1x32x128xf32>
    %66 = vector.shape_cast %65 : vector<1x32x128xf32> to vector<32x128xf32>
    %67 = vector.shape_cast %63 : vector<32x128xf32> to vector<1x32x128xf32>
    tpu.vector_store %arg7[%64, %c0_30, %c0_31], %67 {strides = array<i32>} : memref<2x32x128xf32, #tpu.memory_space<vmem>>, vector<1x32x128xf32>,
    %68 = arith.index_cast %c0_i32 : i32 to index
    %c0_32 = arith.constant 0 : index
    %c0_33 = arith.constant 0 : index
    %69 = vector.load %arg8[%68, %c0_32, %c0_33] : memref<2x32x128xf32, #tpu.memory_space<vmem>>, vector<1x32x128xf32>
    %70 = vector.shape_cast %69 : vector<1x32x128xf32> to vector<32x128xf32>
    %71 = vector.shape_cast %61 : vector<32x128xf32> to vector<1x32x128xf32>
    tpu.vector_store %arg8[%68, %c0_32, %c0_33], %71 {strides = array<i32>} : memref<2x32x128xf32, #tpu.memory_space<vmem>>, vector<1x32x128xf32>,
    %c1_i32_34 = arith.constant 1 : i32
    %72 = arith.index_cast %c1_i32_34 : i32 to index
    %c0_35 = arith.constant 0 : index
    %c0_36 = arith.constant 0 : index
    %73 = vector.load %arg9[%72, %c0_35, %c0_36] : memref<2x64x128xbf16, #tpu.memory_space<vmem>>, vector<1x64x128xbf16>
    %74 = vector.shape_cast %73 : vector<1x64x128xbf16> to vector<64x128xbf16>
    %cst_37 = arith.constant dense<0.000000e+00> : vector<128x128xf32>
    %75 = tpu.matmul %37, %74, %cst_37 {dimension_numbers = #tpu.dot_dimension_numbers<[1], [0], [0], [1], [0, 0, 1, 1], [], []>} : vector<128x64xbf16>, vector<64x128xbf16>, vector<128x128xf32> -> vector<128x128xf32>
    %76 = vector.broadcast %38 : vector<128x1xf32> to vector<128x128xf32>
    %77 = arith.addf %75, %76 : vector<128x128xf32>
    %78 = vector.extract_strided_slice %77 {offsets = [0, 0], sizes = [96, 128], strides = [1, 1]} : vector<128x128xf32> to vector<96x128xf32>
    %79 = arith.negf %78 : vector<96x128xf32>
    %80 = math.exp %79 : vector<96x128xf32>
    %cst_38 = arith.constant 1.000000e+00 : f32
    %81 = vector.broadcast %cst_38 : f32 to vector<96x128xf32>
    %82 = arith.addf %81, %80 : vector<96x128xf32>
    %83 = arith.divf %81, %82 : vector<96x128xf32>
    %84 = vector.extract_strided_slice %83 {offsets = [0, 0], sizes = [32, 128], strides = [1, 1]} : vector<96x128xf32> to vector<32x128xf32>
    %85 = vector.extract_strided_slice %83 {offsets = [32, 0], sizes = [32, 128], strides = [1, 1]} : vector<96x128xf32> to vector<32x128xf32>
    %86 = vector.extract_strided_slice %83 {offsets = [64, 0], sizes = [32, 128], strides = [1, 1]} : vector<96x128xf32> to vector<32x128xf32>
    %87 = vector.extract_strided_slice %77 {offsets = [96, 0], sizes = [32, 128], strides = [1, 1]} : vector<128x128xf32> to vector<32x128xf32>
    %88 = math.tanh %87 : vector<32x128xf32>
    %89 = arith.index_cast %c1_i32_34 : i32 to index
    %c0_39 = arith.constant 0 : index
    %c0_40 = arith.constant 0 : index
    %90 = vector.load %arg3[%89, %c0_39, %c0_40] : memref<2x32x128xf32, #tpu.memory_space<vmem>>, vector<1x32x128xf32>
    %91 = vector.shape_cast %90 : vector<1x32x128xf32> to vector<32x128xf32>
    %92 = arith.mulf %84, %91 : vector<32x128xf32>
    %93 = arith.mulf %85, %88 : vector<32x128xf32>
    %94 = arith.addf %92, %93 : vector<32x128xf32>
    %95 = math.tanh %94 : vector<32x128xf32>
    %96 = arith.mulf %86, %95 : vector<32x128xf32>
    %97 = arith.index_cast %c1_i32_34 : i32 to index
    %c0_41 = arith.constant 0 : index
    %c0_42 = arith.constant 0 : index
    %98 = vector.load %arg7[%97, %c0_41, %c0_42] : memref<2x32x128xf32, #tpu.memory_space<vmem>>, vector<1x32x128xf32>
    %99 = vector.shape_cast %98 : vector<1x32x128xf32> to vector<32x128xf32>
    %100 = vector.shape_cast %96 : vector<32x128xf32> to vector<1x32x128xf32>
    tpu.vector_store %arg7[%97, %c0_41, %c0_42], %100 {strides = array<i32>} : memref<2x32x128xf32, #tpu.memory_space<vmem>>, vector<1x32x128xf32>,
    %101 = arith.index_cast %c1_i32_34 : i32 to index
    %c0_43 = arith.constant 0 : index
    %c0_44 = arith.constant 0 : index
    %102 = vector.load %arg8[%101, %c0_43, %c0_44] : memref<2x32x128xf32, #tpu.memory_space<vmem>>, vector<1x32x128xf32>
    %103 = vector.shape_cast %102 : vector<1x32x128xf32> to vector<32x128xf32>
    %104 = vector.shape_cast %94 : vector<32x128xf32> to vector<1x32x128xf32>
    tpu.vector_store %arg8[%101, %c0_43, %c0_44], %104 {strides = array<i32>} : memref<2x32x128xf32, #tpu.memory_space<vmem>>, vector<1x32x128xf32>,
    %c2_i32 = arith.constant 2 : i32
    return
  }
  func.func @transform_0(%arg0: i32) -> (i32, i32, i32) {
    %c0_i32 = arith.constant 0 : i32
    %c0_i32_0 = arith.constant 0 : i32
    %c0_i32_1 = arith.constant 0 : i32
    return %arg0, %c0_i32, %c0_i32_0 : i32, i32, i32
  }
  func.func @transform_1(%arg0: i32) -> (i32, i32, i32) {
    %c0_i32 = arith.constant 0 : i32
    %c0_i32_0 = arith.constant 0 : i32
    %c0_i32_1 = arith.constant 0 : i32
    return %arg0, %c0_i32, %c0_i32_0 : i32, i32, i32
  }
  func.func @transform_2(%arg0: i32) -> (i32, i32, i32) {
    %c0_i32 = arith.constant 0 : i32
    %c0_i32_0 = arith.constant 0 : i32
    %c0_i32_1 = arith.constant 0 : i32
    return %arg0, %c0_i32, %c0_i32_0 : i32, i32, i32
  }
  func.func @transform_3(%arg0: i32) -> (i32, i32, i32) {
    %c0_i32 = arith.constant 0 : i32
    %c0_i32_0 = arith.constant 0 : i32
    %c0_i32_1 = arith.constant 0 : i32
    %c0_i32_2 = arith.constant 0 : i32
    return %c0_i32, %c0_i32_0, %c0_i32_1 : i32, i32, i32
  }
  func.func @transform_4(%arg0: i32) -> (i32, i32) {
    %c0_i32 = arith.constant 0 : i32
    %c0_i32_0 = arith.constant 0 : i32
    %c0_i32_1 = arith.constant 0 : i32
    return %c0_i32, %c0_i32_0 : i32, i32
  }
  func.func @transform_5(%arg0: i32) -> (i32, i32) {
    %c0_i32 = arith.constant 0 : i32
    %c0_i32_0 = arith.constant 0 : i32
    %c0_i32_1 = arith.constant 0 : i32
    return %c0_i32, %c0_i32_0 : i32, i32
  }
  func.func @transform_6(%arg0: i32) -> (i32, i32, i32) {
    %c0_i32 = arith.constant 0 : i32
    %c0_i32_0 = arith.constant 0 : i32
    %c0_i32_1 = arith.constant 0 : i32
    return %arg0, %c0_i32, %c0_i32_0 : i32, i32, i32
  }
  func.func @transform_7(%arg0: i32) -> (i32, i32, i32) {
    %c0_i32 = arith.constant 0 : i32
    %c0_i32_0 = arith.constant 0 : i32
    %c0_i32_1 = arith.constant 0 : i32
    return %arg0, %c0_i32, %c0_i32_0 : i32, i32, i32
  }
}

</mosaic_0001>

<llo_original>
// kernel: dws_conv_lstm_1d.1
$region0: #{dws_conv_lstm_1d.1}
  #allocation0 [shape = 'u32[]', space=smem, size = 0x4, offset = 0x4, fixed_abs, tag = 'smem constant byte address 0x4 - core index']
  #allocation1 [shape = 'u32[144,128]{1,0:T(1,128)}', space=vmem, size = 0x12000, scoped, tag = 'internal scratch']
  #allocation2 [shape = 'bf16[2,64,128]{2,1,0:T(8,128)(2,1)}', space=vmem, size = 0x8000, scoped, tag = 'scratch operand']
  %s0 = inlined_call_operand.vmem [shape: bf16[2,32,128], index: 0, kind: input, shape index: {}]
  %s1 = inlined_call_operand.vmem [shape: bf16[2,32,128], index: 1, kind: input, shape index: {}]
  %s2 = inlined_call_operand.vmem [shape: f32[2,32,128], index: 2, kind: input, shape index: {}]
  %s3 = inlined_call_operand.vmem [shape: f32[3,32,1], index: 3, kind: input, shape index: {}]
  %s4 = inlined_call_operand.vmem [shape: bf16[128,64], index: 4, kind: input, shape index: {}]
  %s5 = inlined_call_operand.vmem [shape: f32[128,1], index: 5, kind: input, shape index: {}]
  %s6 = inlined_call_operand.hbm [shape: f32[2,32,128], index: 6, kind: output, shape index: {0}]
  %s7 = inlined_call_operand.hbm [shape: f32[2,32,128], index: 7, kind: output, shape index: {1}]
  %8 = xla_tuple %s6, %s7
  %s9 = sld [smem:[#allocation0]]
  $region42: #{dws_conv_lstm_1d.1} parent=0
    _
  %s11 = ssub.s32 1, %s9
  %s12 = scalar_select 0, %s11, %s9
  $region1: #{dws_conv_lstm_1d.1} parent=0
    #allocation3 [shape = 'u8[32768]{0}', space=vmem, size = 0x8000, scoped, tag = 'output window, operand 0, single buffered']
    #allocation4 [shape = 's32[1]{0}', space=sflag, size = 0x4, scoped, tag = 'scoped memory for dws_conv_lstm_1d.1']
    #allocation5 [shape = 'u8[32768]{0}', space=vmem, size = 0x8000, scoped, tag = 'output window, operand 1, single buffered']
    #allocation6 [shape = 's32[1]{0}', space=sflag, size = 0x4, scoped, tag = 'scoped memory for dws_conv_lstm_1d.1']
    %13 = vsyncpa [#allocation4], 0
    %14 = vsyncpa [#allocation6], 0
    // Predicated region
    $region2: #{dws_conv_lstm_1d.1} parent=1 // pred_check
      _
    $region3: #{dws_conv_lstm_1d.1} parent=1 // pred_check_branch
      %16 = sbr.rel (0) target = $region5
    $region4: #{dws_conv_lstm_1d.1} parent=1 // pred_region
      _
    $region5: #{dws_conv_lstm_1d.1} parent=1 // pred_fallthru
      _
    // Predicated region
    $region6: #{dws_conv_lstm_1d.1} parent=1 // pred_check
      _
    $region7: #{dws_conv_lstm_1d.1} parent=1 // pred_check_branch
      %18 = sbr.rel (0) target = $region9
    $region8: #{dws_conv_lstm_1d.1} parent=1 // pred_region
      _
    $region9: #{dws_conv_lstm_1d.1} parent=1 // pred_fallthru
      _
    // Predicated region
    $region10: #{dws_conv_lstm_1d.1} parent=1 // pred_check
      _
    $region11: #{dws_conv_lstm_1d.1} parent=1 // pred_check_branch
      %20 = sbr.rel (0) target = $region13
    $region12: #{dws_conv_lstm_1d.1} parent=1 // pred_region
      _
    $region13: #{dws_conv_lstm_1d.1} parent=1 // pred_fallthru
      _
    // Predicated region
    $region14: #{dws_conv_lstm_1d.1} parent=1 // pred_check
      _
    $region15: #{dws_conv_lstm_1d.1} parent=1 // pred_check_branch
      %22 = sbr.rel (0) target = $region17
    $region16: #{dws_conv_lstm_1d.1} parent=1 // pred_region
      _
    $region17: #{dws_conv_lstm_1d.1} parent=1 // pred_fallthru
      _
    // Predicated region
    $region18: #{dws_conv_lstm_1d.1} parent=1 // pred_check
      _
    $region19: #{dws_conv_lstm_1d.1} parent=1 // pred_check_branch
      %24 = sbr.rel (0) target = $region21
    $region20: #{dws_conv_lstm_1d.1} parent=1 // pred_region
      _
    $region21: #{dws_conv_lstm_1d.1} parent=1 // pred_fallthru
      _
    // Predicated region
    $region22: #{dws_conv_lstm_1d.1} parent=1 // pred_check
      _
    $region23: #{dws_conv_lstm_1d.1} parent=1 // pred_check_branch
      %26 = sbr.rel (0) target = $region25
    $region24: #{dws_conv_lstm_1d.1} parent=1 // pred_region
      _
    $region25: #{dws_conv_lstm_1d.1} parent=1 // pred_fallthru
      _
    %v28 = vld [vmem:[%s1] sm:$0xf]
    %v29 = vld [vmem:[%s1 + $0x4] sm:$0xf]
    %v30 = vld [vmem:[%s1 + $0x8] sm:$0xf]
    %v31 = vld [vmem:[%s1 + $0xc] sm:$0xf]
    %v32 = vld [vmem:[%s1 + $0x10] sm:$0xf]
    %v33 = vld [vmem:[%s1 + $0x14] sm:$0xf]
    %v34 = vld [vmem:[%s1 + $0x18] sm:$0xf]
    %v35 = vld [vmem:[%s1 + $0x1c] sm:$0xf]
    %v36 = vunpack.c.l.bf16 %v28
    %v37 = vunpack.c.l.bf16 %v29
    %v38 = vunpack.c.l.bf16 %v30
    %v39 = vunpack.c.l.bf16 %v31
    %v40 = vunpack.c.l.bf16 %v32
    %v41 = vunpack.c.l.bf16 %v33
    %v42 = vunpack.c.l.bf16 %v34
    %v43 = vunpack.c.l.bf16 %v35
    %v44 = vlaneseq
    %v45 = vand.u32 %v44, 127
    %s46 = scalar_lea.vmem %s3, 32
    %v47 = vld [vmem:[%s46] sm:$0xff]
    %v48 = vld [vmem:[%s46 + $0x8] sm:$0xff]
    %v49 = vld [vmem:[%s46 + $0x10] sm:$0xff]
    %v50 = vld [vmem:[%s46 + $0x18] sm:$0xff]
    %52 = vset.pattern.permute.xlu0 0
    %53 = vperm.xlu0 %52, %v47
    %v54 = vpop.permute.xlu0 %53
    %57 = vset.pattern.permute.xlu0 0
    %58 = vperm.xlu0 %57, %v48
    %v59 = vpop.permute.xlu0 %58
    %62 = vset.pattern.permute.xlu0 0
    %63 = vperm.xlu0 %62, %v49
    %v64 = vpop.permute.xlu0 %63
    %67 = vset.pattern.permute.xlu0 0
    %68 = vperm.xlu0 %67, %v50
    %v69 = vpop.permute.xlu0 %68
    %v71 = vmul.f32 %v54, %v36
    %v72 = vmul.f32 %v59, %v37
    %v73 = vmul.f32 %v64, %v38
    %v74 = vmul.f32 %v69, %v39
    %v75 = vmul.f32 %v54, %v40
    %v76 = vmul.f32 %v59, %v41
    %v77 = vmul.f32 %v64, %v42
    %v78 = vmul.f32 %v69, %v43
    %79 = vrot.lane.b32.xlu0 %v36, 1
    %v80 = vpop.permute.xlu0 %79
    %81 = vrot.lane.b32.xlu0 %v37, 1
    %v82 = vpop.permute.xlu0 %81
    %83 = vrot.lane.b32.xlu0 %v38, 1
    %v84 = vpop.permute.xlu0 %83
    %85 = vrot.lane.b32.xlu0 %v39, 1
    %v86 = vpop.permute.xlu0 %85
    %87 = vrot.lane.b32.xlu0 %v40, 1
    %v88 = vpop.permute.xlu0 %87
    %89 = vrot.lane.b32.xlu0 %v41, 1
    %v90 = vpop.permute.xlu0 %89
    %91 = vrot.lane.b32.xlu0 %v42, 1
    %v92 = vpop.permute.xlu0 %91
    %93 = vrot.lane.b32.xlu0 %v43, 1
    %v94 = vpop.permute.xlu0 %93
    %vm95 = vcmp.ge.s32.totalorder %v45, 1
    %v96 = vsel %vm95, %v80, 0.0
    %v97 = vsel %vm95, %v82, 0.0
    %v98 = vsel %vm95, %v84, 0.0
    %v99 = vsel %vm95, %v86, 0.0
    %v100 = vsel %vm95, %v88, 0.0
    %v101 = vsel %vm95, %v90, 0.0
    %v102 = vsel %vm95, %v92, 0.0
    %v103 = vsel %vm95, %v94, 0.0
    %v104 = vld [vmem:[%s3] sm:$0xff]
    %v105 = vld [vmem:[%s3 + $0x8] sm:$0xff]
    %v106 = vld [vmem:[%s3 + $0x10] sm:$0xff]
    %v107 = vld [vmem:[%s3 + $0x18] sm:$0xff]
    %109 = vset.pattern.permute.xlu0 0
    %110 = vperm.xlu0 %109, %v104
    %v111 = vpop.permute.xlu0 %110
    %114 = vset.pattern.permute.xlu0 0
    %115 = vperm.xlu0 %114, %v105
    %v116 = vpop.permute.xlu0 %115
    %119 = vset.pattern.permute.xlu0 0
    %120 = vperm.xlu0 %119, %v106
    %v121 = vpop.permute.xlu0 %120
    %124 = vset.pattern.permute.xlu0 0
    %125 = vperm.xlu0 %124, %v107
    %v126 = vpop.permute.xlu0 %125
    %v128 = vmul.f32 %v111, %v96
    %v129 = vmul.f32 %v116, %v97
    %v130 = vmul.f32 %v121, %v98
    %v131 = vmul.f32 %v126, %v99
    %v132 = vmul.f32 %v111, %v100
    %v133 = vmul.f32 %v116, %v101
    %v134 = vmul.f32 %v121, %v102
    %v135 = vmul.f32 %v126, %v103
    %v136 = vadd.f32 %v71, %v128
    %v137 = vadd.f32 %v72, %v129
    %v138 = vadd.f32 %v73, %v130
    %v139 = vadd.f32 %v74, %v131
    %v140 = vadd.f32 %v75, %v132
    %v141 = vadd.f32 %v76, %v133
    %v142 = vadd.f32 %v77, %v134
    %v143 = vadd.f32 %v78, %v135
    %144 = vrot.lane.b32.xlu0 %v36, 127
    %v145 = vpop.permute.xlu0 %144
    %146 = vrot.lane.b32.xlu0 %v37, 127
    %v147 = vpop.permute.xlu0 %146
    %148 = vrot.lane.b32.xlu0 %v38, 127
    %v149 = vpop.permute.xlu0 %148
    %150 = vrot.lane.b32.xlu0 %v39, 127
    %v151 = vpop.permute.xlu0 %150
    %152 = vrot.lane.b32.xlu0 %v40, 127
    %v153 = vpop.permute.xlu0 %152
    %154 = vrot.lane.b32.xlu0 %v41, 127
    %v155 = vpop.permute.xlu0 %154
    %156 = vrot.lane.b32.xlu0 %v42, 127
    %v157 = vpop.permute.xlu0 %156
    %158 = vrot.lane.b32.xlu0 %v43, 127
    %v159 = vpop.permute.xlu0 %158
    %vm160 = vcmp.lt.s32.totalorder %v45, 127
    %v161 = vsel %vm160, %v145, 0.0
    %v162 = vsel %vm160, %v147, 0.0
    %v163 = vsel %vm160, %v149, 0.0
    %v164 = vsel %vm160, %v151, 0.0
    %v165 = vsel %vm160, %v153, 0.0
    %v166 = vsel %vm160, %v155, 0.0
    %v167 = vsel %vm160, %v157, 0.0
    %v168 = vsel %vm160, %v159, 0.0
    %s169 = scalar_lea.vmem %s3, 64
    %v170 = vld [vmem:[%s169] sm:$0xff]
    %v171 = vld [vmem:[%s169 + $0x8] sm:$0xff]
    %v172 = vld [vmem:[%s169 + $0x10] sm:$0xff]
    %v173 = vld [vmem:[%s169 + $0x18] sm:$0xff]
    %175 = vset.pattern.permute.xlu0 0
    %176 = vperm.xlu0 %175, %v170
    %v177 = vpop.permute.xlu0 %176
    %180 = vset.pattern.permute.xlu0 0
    %181 = vperm.xlu0 %180, %v171
    %v182 = vpop.permute.xlu0 %181
    %185 = vset.pattern.permute.xlu0 0
    %186 = vperm.xlu0 %185, %v172
    %v187 = vpop.permute.xlu0 %186
    %190 = vset.pattern.permute.xlu0 0
    %191 = vperm.xlu0 %190, %v173
    %v192 = vpop.permute.xlu0 %191
    %v194 = vmul.f32 %v177, %v161
    %v195 = vmul.f32 %v182, %v162
    %v196 = vmul.f32 %v187, %v163
    %v197 = vmul.f32 %v192, %v164
    %v198 = vmul.f32 %v177, %v165
    %v199 = vmul.f32 %v182, %v166
    %v200 = vmul.f32 %v187, %v167
    %v201 = vmul.f32 %v192, %v168
    %v202 = vadd.f32 %v136, %v194
    %v203 = vadd.f32 %v137, %v195
    %v204 = vadd.f32 %v138, %v196
    %v205 = vadd.f32 %v139, %v197
    %v206 = vadd.f32 %v140, %v198
    %v207 = vadd.f32 %v141, %v199
    %v208 = vadd.f32 %v142, %v200
    %v209 = vadd.f32 %v143, %v201
    %v210 = vld [vmem:[%s0] sm:$0xf]
    %v211 = vld [vmem:[%s0 + $0x4] sm:$0xf]
    %v212 = vld [vmem:[%s0 + $0x8] sm:$0xf]
    %v213 = vld [vmem:[%s0 + $0xc] sm:$0xf]
    %v214 = vld [vmem:[%s0 + $0x10] sm:$0xf]
    %v215 = vld [vmem:[%s0 + $0x14] sm:$0xf]
    %v216 = vld [vmem:[%s0 + $0x18] sm:$0xf]
    %v217 = vld [vmem:[%s0 + $0x1c] sm:$0xf]
    %218 = vst [vmem:[#allocation2] sm:$0xf] %v210
    %219 = vst [vmem:[#allocation2 + $0x4] sm:$0xf] %v211
    %220 = vst [vmem:[#allocation2 + $0x8] sm:$0xf] %v212
    %221 = vst [vmem:[#allocation2 + $0xc] sm:$0xf] %v213
    %222 = vst [vmem:[#allocation2 + $0x20] sm:$0xf] %v214
    %223 = vst [vmem:[#allocation2 + $0x24] sm:$0xf] %v215
    %224 = vst [vmem:[#allocation2 + $0x28] sm:$0xf] %v216
    %225 = vst [vmem:[#allocation2 + $0x2c] sm:$0xf] %v217
    %v226 = vpack.c.bf16 %v203, %v202
    %v227 = vpack.c.bf16 %v205, %v204
    %v228 = vpack.c.bf16 %v207, %v206
    %v229 = vpack.c.bf16 %v209, %v208
    %v234 = vunpack.c.l.b16 %v226
    %v235 = vunpack.c.h.b16 %v226
    %v236 = vunpack.c.l.b16 %v227
    %v237 = vunpack.c.h.b16 %v227
    %v238 = vunpack.c.l.b16 %v228
    %v239 = vunpack.c.h.b16 %v228
    %v240 = vunpack.c.l.b16 %v229
    %v241 = vunpack.c.h.b16 %v229
    %v242 = vpack.c.b16 %v234, %v234
    %v243 = vpack.c.b16 %v235, %v235
    %v244 = vpack.c.b16 %v236, %v236
    %v245 = vpack.c.b16 %v237, %v237
    %v246 = vpack.c.b16 %v238, %v238
    %v247 = vpack.c.b16 %v239, %v239
    %v248 = vpack.c.b16 %v240, %v240
    %v249 = vpack.c.b16 %v241, %v241
    %258 = vst [vmem:[#allocation2 + $0x10] sm:$0xf] %v242
    %259 = vst [vmem:[#allocation2 + $0x14] sm:$0xf] %v243
    %260 = vst [vmem:[#allocation2 + $0x18] sm:$0xf] %v244
    %261 = vst [vmem:[#allocation2 + $0x1c] sm:$0xf] %v245
    %262 = vst [vmem:[#allocation2 + $0x30] sm:$0xf] %v246
    %263 = vst [vmem:[#allocation2 + $0x34] sm:$0xf] %v247
    %264 = vst [vmem:[#allocation2 + $0x38] sm:$0xf] %v248
    %265 = vst [vmem:[#allocation2 + $0x3c] sm:$0xf] %v249
    %v266 = vld [vmem:[%s4] sm:$0xf]
    %v267 = vld [vmem:[%s4 + $0x4] sm:$0xf]
    %v268 = vld [vmem:[%s4 + $0x8] sm:$0xf]
    %v269 = vld [vmem:[%s4 + $0xc] sm:$0xf]
    %v270 = vld [vmem:[%s4 + $0x10] sm:$0xf]
    %v271 = vld [vmem:[%s4 + $0x14] sm:$0xf]
    %v272 = vld [vmem:[%s4 + $0x18] sm:$0xf]
    %v273 = vld [vmem:[%s4 + $0x1c] sm:$0xf]
    %v274 = vld [vmem:[%s4 + $0x20] sm:$0xf]
    %v275 = vld [vmem:[%s4 + $0x24] sm:$0xf]
    %v276 = vld [vmem:[%s4 + $0x28] sm:$0xf]
    %v277 = vld [vmem:[%s4 + $0x2c] sm:$0xf]
    %v278 = vld [vmem:[%s4 + $0x30] sm:$0xf]
    %v279 = vld [vmem:[%s4 + $0x34] sm:$0xf]
    %v280 = vld [vmem:[%s4 + $0x38] sm:$0xf]
    %v281 = vld [vmem:[%s4 + $0x3c] sm:$0xf]
    %v282 = vld [vmem:[%s5] sm:$0xff]
    %v283 = vld [vmem:[%s5 + $0x8] sm:$0xff]
    %v284 = vld [vmem:[%s5 + $0x10] sm:$0xff]
    %v285 = vld [vmem:[%s5 + $0x18] sm:$0xff]
    %v286 = vld [vmem:[%s5 + $0x20] sm:$0xff]
    %v287 = vld [vmem:[%s5 + $0x28] sm:$0xff]
    %v288 = vld [vmem:[%s5 + $0x30] sm:$0xff]
    %v289 = vld [vmem:[%s5 + $0x38] sm:$0xff]
    %v290 = vld [vmem:[%s5 + $0x40] sm:$0xff]
    %v291 = vld [vmem:[%s5 + $0x48] sm:$0xff]
    %v292 = vld [vmem:[%s5 + $0x50] sm:$0xff]
    %v293 = vld [vmem:[%s5 + $0x58] sm:$0xff]
    %v294 = vld [vmem:[%s5 + $0x60] sm:$0xff]
    %v295 = vld [vmem:[%s5 + $0x68] sm:$0xff]
    %v296 = vld [vmem:[%s5 + $0x70] sm:$0xff]
    %v297 = vld [vmem:[%s5 + $0x78] sm:$0xff]
    %v298 = vld [vmem:[#allocation2] sm:$0xf]
    %v299 = vld [vmem:[#allocation2 + $0x4] sm:$0xf]
    %v300 = vld [vmem:[#allocation2 + $0x8] sm:$0xf]
    %v301 = vld [vmem:[#allocation2 + $0xc] sm:$0xf]
    %v302 = vld [vmem:[#allocation2 + $0x10] sm:$0xf]
    %v303 = vld [vmem:[#allocation2 + $0x14] sm:$0xf]
    %v304 = vld [vmem:[#allocation2 + $0x18] sm:$0xf]
    %v305 = vld [vmem:[#allocation2 + $0x1c] sm:$0xf]
    %307 = vset.pattern.permute.xlu0 0
    %308 = vperm.xlu0 %307, %v282
    %v309 = vpop.permute.xlu0 %308
    %312 = vset.pattern.permute.xlu0 0
    %313 = vperm.xlu0 %312, %v283
    %v314 = vpop.permute.xlu0 %313
    %317 = vset.pattern.permute.xlu0 0
    %318 = vperm.xlu0 %317, %v284
    %v319 = vpop.permute.xlu0 %318
    %322 = vset.pattern.permute.xlu0 0
    %323 = vperm.xlu0 %322, %v285
    %v324 = vpop.permute.xlu0 %323
    %327 = vset.pattern.permute.xlu0 0
    %328 = vperm.xlu0 %327, %v286
    %v329 = vpop.permute.xlu0 %328
    %332 = vset.pattern.permute.xlu0 0
    %333 = vperm.xlu0 %332, %v287
    %v334 = vpop.permute.xlu0 %333
    %337 = vset.pattern.permute.xlu0 0
    %338 = vperm.xlu0 %337, %v288
    %v339 = vpop.permute.xlu0 %338
    %342 = vset.pattern.permute.xlu0 0
    %343 = vperm.xlu0 %342, %v289
    %v344 = vpop.permute.xlu0 %343
    %347 = vset.pattern.permute.xlu0 0
    %348 = vperm.xlu0 %347, %v290
    %v349 = vpop.permute.xlu0 %348
    %352 = vset.pattern.permute.xlu0 0
    %353 = vperm.xlu0 %352, %v291
    %v354 = vpop.permute.xlu0 %353
    %357 = vset.pattern.permute.xlu0 0
    %358 = vperm.xlu0 %357, %v292
    %v359 = vpop.permute.xlu0 %358
    %362 = vset.pattern.permute.xlu0 0
    %363 = vperm.xlu0 %362, %v293
    %v364 = vpop.permute.xlu0 %363
    %367 = vset.pattern.permute.xlu0 0
    %368 = vperm.xlu0 %367, %v294
    %v369 = vpop.permute.xlu0 %368
    %372 = vset.pattern.permute.xlu0 0
    %373 = vperm.xlu0 %372, %v295
    %v374 = vpop.permute.xlu0 %373
    %377 = vset.pattern.permute.xlu0 0
    %378 = vperm.xlu0 %377, %v296
    %v379 = vpop.permute.xlu0 %378
    %382 = vset.pattern.permute.xlu0 0
    %383 = vperm.xlu0 %382, %v297
    %v384 = vpop.permute.xlu0 %383
    %v402 = vunpack.c.l.b16 %v266
    %v403 = vunpack.c.l.b16 %v267
    %v404 = vunpack.c.l.b16 %v268
    %v405 = vunpack.c.l.b16 %v269
    %v406 = vunpack.c.l.b16 %v270
    %v407 = vunpack.c.l.b16 %v271
    %v408 = vunpack.c.l.b16 %v272
    %v409 = vunpack.c.l.b16 %v273
    %v410 = vunpack.c.l.b16 %v274
    %v411 = vunpack.c.l.b16 %v275
    %v412 = vunpack.c.l.b16 %v276
    %v413 = vunpack.c.l.b16 %v277
    %v414 = vunpack.c.l.b16 %v278
    %v415 = vunpack.c.l.b16 %v279
    %v416 = vunpack.c.l.b16 %v280
    %v417 = vunpack.c.l.b16 %v281
    %v418 = vpack.c.b16 %v403, %v402
    %v419 = vpack.c.b16 %v405, %v404
    %v420 = vpack.c.b16 %v407, %v406
    %v421 = vpack.c.b16 %v409, %v408
    %v422 = vpack.c.b16 %v411, %v410
    %v423 = vpack.c.b16 %v413, %v412
    %v424 = vpack.c.b16 %v415, %v414
    %v425 = vpack.c.b16 %v417, %v416
    %v434 = vunpack.c.l.b16 %v298
    %v435 = vunpack.c.l.b16 %v299
    %v436 = vunpack.c.l.b16 %v300
    %v437 = vunpack.c.l.b16 %v301
    %v438 = vunpack.c.l.b16 %v302
    %v439 = vunpack.c.l.b16 %v303
    %v440 = vunpack.c.l.b16 %v304
    %v441 = vunpack.c.l.b16 %v305
    %v442 = vpack.c.b16 %v435, %v434
    %v443 = vpack.c.b16 %v437, %v436
    %v444 = vpack.c.b16 %v439, %v438
    %v445 = vpack.c.b16 %v441, %v440
    %vm450 = vcmask 523264
    %v452 = vsel %vm450, %v418, 0
    %v455 = vsel %vm450, %v419, 0
    %v458 = vsel %vm450, %v420, 0
    %v461 = vsel %vm450, %v421, 0
    %v464 = vsel %vm450, %v422, 0
    %v467 = vsel %vm450, %v423, 0
    %v470 = vsel %vm450, %v424, 0
    %v473 = vsel %vm450, %v425, 0
    %475 = vmatprep.subr.bf16.mxu0 0
    %476 = vmatpush1.bf16.msra.mxu0 0
    %477 = vmatprep.subr.bf16.mxu0 0
    %478 = vmatpush1.bf16.msra.mxu0 0
    %479 = vmatprep.subr.bf16.mxu0 0
    %480 = vmatpush1.bf16.msra.mxu0 0
    %481 = vmatprep.subr.bf16.mxu0 0
    %482 = vmatpush1.bf16.msra.mxu0 0
    %483 = vmatprep.subr.bf16.mxu0 0
    %484 = vmatpush1.bf16.msra.mxu0 %v445
    %485 = vmatprep.subr.bf16.mxu0 0
    %486 = vmatpush1.bf16.msra.mxu0 %v444
    %487 = vmatprep.subr.bf16.mxu0 0
    %488 = vmatpush1.bf16.msra.mxu0 %v443
    %489 = vmatprep.subr.bf16.mxu0 0
    %490 = vmatpush1.bf16.msra.mxu0 %v442
    %491 = vmatprep.subr.bf16.mxu0 0
    %492 = vmatpush2.bf16.msra.mxu0 0
    %493 = vmatprep.subr.bf16.mxu0 0
    %494 = vmatpush2.bf16.msra.mxu0 0
    %495 = vmatprep.subr.bf16.mxu0 0
    %496 = vmatpush2.bf16.msra.mxu0 0
    %497 = vmatprep.subr.bf16.mxu0 0
    %498 = vmatpush2.bf16.msra.mxu0 0
    %499 = vmatprep.subr.bf16.mxu0 0
    %500 = vmatpush2.bf16.msra.mxu0 0
    %501 = vmatprep.subr.bf16.mxu0 0
    %502 = vmatpush2.bf16.msra.mxu0 0
    %503 = vmatprep.subr.bf16.mxu0 0
    %504 = vmatpush2.bf16.msra.mxu0 0
    %505 = vmatprep.subr.bf16.mxu0 0
    %506 = vmatpush2.bf16.msra.mxu0 0
    %507 = vmatprep.mubr.bf16.mxu0 0
    %508 = vmatmul.mubr.bf16.gmra.mxu0 %v452
    %v509 = vpop.f32.mrf.mxu0
    %v510 = vadd.f32 %v309, %v509
    %v511 = vpop.f32.mrf.mxu0
    %v512 = vpop.f32.mrf.mxu0
    %v513 = vadd.f32 %v314, %v512
    %v514 = vpop.f32.mrf.mxu0
    %515 = vmatprep.mubr.bf16.mxu0 0
    %516 = vmatmul.mubr.bf16.gmra.mxu0 %v455
    %v517 = vpop.f32.mrf.mxu0
    %v518 = vadd.f32 %v319, %v517
    %v519 = vpop.f32.mrf.mxu0
    %v520 = vpop.f32.mrf.mxu0
    %v521 = vadd.f32 %v324, %v520
    %v522 = vpop.f32.mrf.mxu0
    %523 = vmatprep.mubr.bf16.mxu0 0
    %524 = vmatmul.mubr.bf16.gmra.mxu0 %v458
    %v525 = vpop.f32.mrf.mxu0
    %v526 = vadd.f32 %v329, %v525
    %v527 = vpop.f32.mrf.mxu0
    %v528 = vpop.f32.mrf.mxu0
    %v529 = vadd.f32 %v334, %v528
    %v530 = vpop.f32.mrf.mxu0
    %531 = vmatprep.mubr.bf16.mxu0 0
    %532 = vmatmul.mubr.bf16.gmra.mxu0 %v461
    %v533 = vpop.f32.mrf.mxu0
    %v534 = vadd.f32 %v339, %v533
    %v535 = vpop.f32.mrf.mxu0
    %v536 = vpop.f32.mrf.mxu0
    %v537 = vadd.f32 %v344, %v536
    %v538 = vpop.f32.mrf.mxu0
    %539 = vmatprep.mubr.bf16.mxu0 0
    %540 = vmatmul.mubr.bf16.gmra.mxu0 %v464
    %v541 = vpop.f32.mrf.mxu0
    %v542 = vadd.f32 %v349, %v541
    %v543 = vpop.f32.mrf.mxu0
    %v544 = vpop.f32.mrf.mxu0
    %v545 = vadd.f32 %v354, %v544
    %v546 = vpop.f32.mrf.mxu0
    %547 = vmatprep.mubr.bf16.mxu0 0
    %548 = vmatmul.mubr.bf16.gmra.mxu0 %v467
    %v549 = vpop.f32.mrf.mxu0
    %v550 = vadd.f32 %v359, %v549
    %v551 = vpop.f32.mrf.mxu0
    %v552 = vpop.f32.mrf.mxu0
    %v553 = vadd.f32 %v364, %v552
    %v554 = vpop.f32.mrf.mxu0
    %555 = vmatprep.mubr.bf16.mxu0 0
    %556 = vmatmul.mubr.bf16.gmra.mxu0 %v470
    %v557 = vpop.f32.mrf.mxu0
    %v558 = vadd.f32 %v369, %v557
    %v559 = vpop.f32.mrf.mxu0
    %v560 = vpop.f32.mrf.mxu0
    %v561 = vadd.f32 %v374, %v560
    %v562 = vpop.f32.mrf.mxu0
    %563 = vmatprep.mubr.bf16.mxu0 0
    %564 = vmatmul.mubr.bf16.gmra.mxu0 %v473
    %v565 = vpop.f32.mrf.mxu0
    %v566 = vadd.f32 %v379, %v565
    %v567 = vpop.f32.mrf.mxu0
    %v568 = vpop.f32.mrf.mxu0
    %v569 = vadd.f32 %v384, %v568
    %v570 = vpop.f32.mrf.mxu0
    %571 = vdwg.mxu0
    %v572 = vxor.u32 %v510, 2147483648
    %v573 = vxor.u32 %v513, 2147483648
    %v574 = vxor.u32 %v518, 2147483648
    %v575 = vxor.u32 %v521, 2147483648
    %v576 = vxor.u32 %v526, 2147483648
    %v577 = vxor.u32 %v529, 2147483648
    %v578 = vxor.u32 %v534, 2147483648
    %v579 = vxor.u32 %v537, 2147483648
    %v580 = vxor.u32 %v542, 2147483648
    %v581 = vxor.u32 %v545, 2147483648
    %v582 = vxor.u32 %v550, 2147483648
    %v583 = vxor.u32 %v553, 2147483648
    %v584 = vmul.f32 %v572, 1.442695
    %v585 = vpow.pop %v584
    %v586 = vmul.f32 %v573, 1.442695
    %v587 = vpow.pop %v586
    %v588 = vmul.f32 %v574, 1.442695
    %v589 = vpow.pop %v588
    %v590 = vmul.f32 %v575, 1.442695
    %v591 = vpow.pop %v590
    %v592 = vmul.f32 %v576, 1.442695
    %v593 = vpow.pop %v592
    %v594 = vmul.f32 %v577, 1.442695
    %v595 = vpow.pop %v594
    %v596 = vmul.f32 %v578, 1.442695
    %v597 = vpow.pop %v596
    %v598 = vmul.f32 %v579, 1.442695
    %v599 = vpow.pop %v598
    %v600 = vmul.f32 %v580, 1.442695
    %v601 = vpow.pop %v600
    %v602 = vmul.f32 %v581, 1.442695
    %v603 = vpow.pop %v602
    %v604 = vmul.f32 %v582, 1.442695
    %v605 = vpow.pop %v604
    %v606 = vmul.f32 %v583, 1.442695
    %v607 = vpow.pop %v606
    %v608 = vadd.f32 %v585, 1.0
    %v609 = vadd.f32 %v587, 1.0
    %v610 = vadd.f32 %v589, 1.0
    %v611 = vadd.f32 %v591, 1.0
    %v612 = vadd.f32 %v593, 1.0
    %v613 = vadd.f32 %v595, 1.0
    %v614 = vadd.f32 %v597, 1.0
    %v615 = vadd.f32 %v599, 1.0
    %v616 = vadd.f32 %v601, 1.0
    %v617 = vadd.f32 %v603, 1.0
    %v618 = vadd.f32 %v605, 1.0
    %v619 = vadd.f32 %v607, 1.0
    %v620 = vrcp.pop %v608
    %v621 = vmul.f32 1.0, %v620
    %v622 = vrcp.pop %v609
    %v623 = vmul.f32 1.0, %v622
    %v624 = vrcp.pop %v610
    %v625 = vmul.f32 1.0, %v624
    %v626 = vrcp.pop %v611
    %v627 = vmul.f32 1.0, %v626
    %v628 = vrcp.pop %v612
    %v629 = vmul.f32 1.0, %v628
    %v630 = vrcp.pop %v613
    %v631 = vmul.f32 1.0, %v630
    %v632 = vrcp.pop %v614
    %v633 = vmul.f32 1.0, %v632
    %v634 = vrcp.pop %v615
    %v635 = vmul.f32 1.0, %v634
    %v636 = vrcp.pop %v616
    %v637 = vmul.f32 1.0, %v636
    %v638 = vrcp.pop %v617
    %v639 = vmul.f32 1.0, %v638
    %v640 = vrcp.pop %v618
    %v641 = vmul.f32 1.0, %v640
    %v642 = vrcp.pop %v619
    %v643 = vmul.f32 1.0, %v642
    %v644 = vtanh.pop %v558
    %v645 = vtanh.pop %v561
    %v646 = vtanh.pop %v566
    %v647 = vtanh.pop %v569
    %v648 = vld [vmem:[%s2] sm:$0xff]
    %v649 = vld [vmem:[%s2 + $0x8] sm:$0xff]
    %v650 = vld [vmem:[%s2 + $0x10] sm:$0xff]
    %v651 = vld [vmem:[%s2 + $0x18] sm:$0xff]
    %v652 = vmul.f32 %v621, %v648
    %v653 = vmul.f32 %v623, %v649
    %v654 = vmul.f32 %v625, %v650
    %v655 = vmul.f32 %v627, %v651
    %v656 = vmul.f32 %v629, %v644
    %v657 = vmul.f32 %v631, %v645
    %v658 = vmul.f32 %v633, %v646
    %v659 = vmul.f32 %v635, %v647
    %v660 = vadd.f32 %v652, %v656
    %v661 = vadd.f32 %v653, %v657
    %v662 = vadd.f32 %v654, %v658
    %v663 = vadd.f32 %v655, %v659
    %v664 = vtanh.pop %v660
    %v665 = vtanh.pop %v661
    %v666 = vtanh.pop %v662
    %v667 = vtanh.pop %v663
    %v668 = vmul.f32 %v637, %v664
    %v669 = vmul.f32 %v639, %v665
    %v670 = vmul.f32 %v641, %v666
    %v671 = vmul.f32 %v643, %v667
    %672 = vst [vmem:[#allocation3] sm:$0xff] %v668
    %673 = vst [vmem:[#allocation3 + $0x8] sm:$0xff] %v669
    %674 = vst [vmem:[#allocation3 + $0x10] sm:$0xff] %v670
    %675 = vst [vmem:[#allocation3 + $0x18] sm:$0xff] %v671
    %676 = vst [vmem:[#allocation5] sm:$0xff] %v660
    %677 = vst [vmem:[#allocation5 + $0x8] sm:$0xff] %v661
    %678 = vst [vmem:[#allocation5 + $0x10] sm:$0xff] %v662
    %679 = vst [vmem:[#allocation5 + $0x18] sm:$0xff] %v663
    %s680 = scalar_lea.vmem [#allocation2], 32
    %v681 = vld [vmem:[%s680] sm:$0xf]
    %v682 = vld [vmem:[%s680 + $0x4] sm:$0xf]
    %v683 = vld [vmem:[%s680 + $0x8] sm:$0xf]
    %v684 = vld [vmem:[%s680 + $0xc] sm:$0xf]
    %v685 = vld [vmem:[%s680 + $0x10] sm:$0xf]
    %v686 = vld [vmem:[%s680 + $0x14] sm:$0xf]
    %v687 = vld [vmem:[%s680 + $0x18] sm:$0xf]
    %v688 = vld [vmem:[%s680 + $0x1c] sm:$0xf]
    %v697 = vunpack.c.l.b16 %v681
    %v698 = vunpack.c.l.b16 %v682
    %v699 = vunpack.c.l.b16 %v683
    %v700 = vunpack.c.l.b16 %v684
    %v701 = vunpack.c.l.b16 %v685
    %v702 = vunpack.c.l.b16 %v686
    %v703 = vunpack.c.l.b16 %v687
    %v704 = vunpack.c.l.b16 %v688
    %v705 = vpack.c.b16 %v698, %v697
    %v706 = vpack.c.b16 %v700, %v699
    %v707 = vpack.c.b16 %v702, %v701
    %v708 = vpack.c.b16 %v704, %v703
    %713 = vmatprep.subr.bf16.mxu0 0
    %714 = vmatpush1.bf16.msra.mxu0 0
    %715 = vmatprep.subr.bf16.mxu0 0
    %716 = vmatpush1.bf16.msra.mxu0 0
    %717 = vmatprep.subr.bf16.mxu0 0
    %718 = vmatpush1.bf16.msra.mxu0 0
    %719 = vmatprep.subr.bf16.mxu0 0
    %720 = vmatpush1.bf16.msra.mxu0 0
    %721 = vmatprep.subr.bf16.mxu0 0
    %722 = vmatpush1.bf16.msra.mxu0 %v708
    %723 = vmatprep.subr.bf16.mxu0 0
    %724 = vmatpush1.bf16.msra.mxu0 %v707
    %725 = vmatprep.subr.bf16.mxu0 0
    %726 = vmatpush1.bf16.msra.mxu0 %v706
    %727 = vmatprep.subr.bf16.mxu0 0
    %728 = vmatpush1.bf16.msra.mxu0 %v705
    %729 = vmatprep.subr.bf16.mxu0 0
    %730 = vmatpush2.bf16.msra.mxu0 0
    %731 = vmatprep.subr.bf16.mxu0 0
    %732 = vmatpush2.bf16.msra.mxu0 0
    %733 = vmatprep.subr.bf16.mxu0 0
    %734 = vmatpush2.bf16.msra.mxu0 0
    %735 = vmatprep.subr.bf16.mxu0 0
    %736 = vmatpush2.bf16.msra.mxu0 0
    %737 = vmatprep.subr.bf16.mxu0 0
    %738 = vmatpush2.bf16.msra.mxu0 0
    %739 = vmatprep.subr.bf16.mxu0 0
    %740 = vmatpush2.bf16.msra.mxu0 0
    %741 = vmatprep.subr.bf16.mxu0 0
    %742 = vmatpush2.bf16.msra.mxu0 0
    %743 = vmatprep.subr.bf16.mxu0 0
    %744 = vmatpush2.bf16.msra.mxu0 0
    %745 = vmatprep.mubr.bf16.mxu0 0
    %746 = vmatmul.mubr.bf16.gmra.mxu0 %v452
    %v747 = vpop.f32.mrf.mxu0
    %v748 = vadd.f32 %v309, %v747
    %v749 = vpop.f32.mrf.mxu0
    %v750 = vpop.f32.mrf.mxu0
    %v751 = vadd.f32 %v314, %v750
    %v752 = vpop.f32.mrf.mxu0
    %753 = vmatprep.mubr.bf16.mxu0 0
    %754 = vmatmul.mubr.bf16.gmra.mxu0 %v455
    %v755 = vpop.f32.mrf.mxu0
    %v756 = vadd.f32 %v319, %v755
    %v757 = vpop.f32.mrf.mxu0
    %v758 = vpop.f32.mrf.mxu0
    %v759 = vadd.f32 %v324, %v758
    %v760 = vpop.f32.mrf.mxu0
    %761 = vmatprep.mubr.bf16.mxu0 0
    %762 = vmatmul.mubr.bf16.gmra.mxu0 %v458
    %v763 = vpop.f32.mrf.mxu0
    %v764 = vadd.f32 %v329, %v763
    %v765 = vpop.f32.mrf.mxu0
    %v766 = vpop.f32.mrf.mxu0
    %v767 = vadd.f32 %v334, %v766
    %v768 = vpop.f32.mrf.mxu0
    %769 = vmatprep.mubr.bf16.mxu0 0
    %770 = vmatmul.mubr.bf16.gmra.mxu0 %v461
    %v771 = vpop.f32.mrf.mxu0
    %v772 = vadd.f32 %v339, %v771
    %v773 = vpop.f32.mrf.mxu0
    %v774 = vpop.f32.mrf.mxu0
    %v775 = vadd.f32 %v344, %v774
    %v776 = vpop.f32.mrf.mxu0
    %777 = vmatprep.mubr.bf16.mxu0 0
    %778 = vmatmul.mubr.bf16.gmra.mxu0 %v464
    %v779 = vpop.f32.mrf.mxu0
    %v780 = vadd.f32 %v349, %v779
    %v781 = vpop.f32.mrf.mxu0
    %v782 = vpop.f32.mrf.mxu0
    %v783 = vadd.f32 %v354, %v782
    %v784 = vpop.f32.mrf.mxu0
    %785 = vmatprep.mubr.bf16.mxu0 0
    %786 = vmatmul.mubr.bf16.gmra.mxu0 %v467
    %v787 = vpop.f32.mrf.mxu0
    %v788 = vadd.f32 %v359, %v787
    %v789 = vpop.f32.mrf.mxu0
    %v790 = vpop.f32.mrf.mxu0
    %v791 = vadd.f32 %v364, %v790
    %v792 = vpop.f32.mrf.mxu0
    %793 = vmatprep.mubr.bf16.mxu0 0
    %794 = vmatmul.mubr.bf16.gmra.mxu0 %v470
    %v795 = vpop.f32.mrf.mxu0
    %v796 = vadd.f32 %v369, %v795
    %v797 = vpop.f32.mrf.mxu0
    %v798 = vpop.f32.mrf.mxu0
    %v799 = vadd.f32 %v374, %v798
    %v800 = vpop.f32.mrf.mxu0
    %801 = vmatprep.mubr.bf16.mxu0 0
    %802 = vmatmul.mubr.bf16.gmra.mxu0 %v473
    %v803 = vpop.f32.mrf.mxu0
    %v804 = vadd.f32 %v379, %v803
    %v805 = vpop.f32.mrf.mxu0
    %v806 = vpop.f32.mrf.mxu0
    %v807 = vadd.f32 %v384, %v806
    %v808 = vpop.f32.mrf.mxu0
    %809 = vdwg.mxu0
    %v810 = vxor.u32 %v748, 2147483648
    %v811 = vxor.u32 %v751, 2147483648
    %v812 = vxor.u32 %v756, 2147483648
    %v813 = vxor.u32 %v759, 2147483648
    %v814 = vxor.u32 %v764, 2147483648
    %v815 = vxor.u32 %v767, 2147483648
    %v816 = vxor.u32 %v772, 2147483648
    %v817 = vxor.u32 %v775, 2147483648
    %v818 = vxor.u32 %v780, 2147483648
    %v819 = vxor.u32 %v783, 2147483648
    %v820 = vxor.u32 %v788, 2147483648
    %v821 = vxor.u32 %v791, 2147483648
    %v822 = vmul.f32 %v810, 1.442695
    %v823 = vpow.pop %v822
    %v824 = vmul.f32 %v811, 1.442695
    %v825 = vpow.pop %v824
    %v826 = vmul.f32 %v812, 1.442695
    %v827 = vpow.pop %v826
    %v828 = vmul.f32 %v813, 1.442695
    %v829 = vpow.pop %v828
    %v830 = vmul.f32 %v814, 1.442695
    %v831 = vpow.pop %v830
    %v832 = vmul.f32 %v815, 1.442695
    %v833 = vpow.pop %v832
    %v834 = vmul.f32 %v816, 1.442695
    %v835 = vpow.pop %v834
    %v836 = vmul.f32 %v817, 1.442695
    %v837 = vpow.pop %v836
    %v838 = vmul.f32 %v818, 1.442695
    %v839 = vpow.pop %v838
    %v840 = vmul.f32 %v819, 1.442695
    %v841 = vpow.pop %v840
    %v842 = vmul.f32 %v820, 1.442695
    %v843 = vpow.pop %v842
    %v844 = vmul.f32 %v821, 1.442695
    %v845 = vpow.pop %v844
    %v846 = vadd.f32 %v823, 1.0
    %v847 = vadd.f32 %v825, 1.0
    %v848 = vadd.f32 %v827, 1.0
    %v849 = vadd.f32 %v829, 1.0
    %v850 = vadd.f32 %v831, 1.0
    %v851 = vadd.f32 %v833, 1.0
    %v852 = vadd.f32 %v835, 1.0
    %v853 = vadd.f32 %v837, 1.0
    %v854 = vadd.f32 %v839, 1.0
    %v855 = vadd.f32 %v841, 1.0
    %v856 = vadd.f32 %v843, 1.0
    %v857 = vadd.f32 %v845, 1.0
    %v858 = vrcp.pop %v846
    %v859 = vmul.f32 1.0, %v858
    %v860 = vrcp.pop %v847
    %v861 = vmul.f32 1.0, %v860
    %v862 = vrcp.pop %v848
    %v863 = vmul.f32 1.0, %v862
    %v864 = vrcp.pop %v849
    %v865 = vmul.f32 1.0, %v864
    %v866 = vrcp.pop %v850
    %v867 = vmul.f32 1.0, %v866
    %v868 = vrcp.pop %v851
    %v869 = vmul.f32 1.0, %v868
    %v870 = vrcp.pop %v852
    %v871 = vmul.f32 1.0, %v870
    %v872 = vrcp.pop %v853
    %v873 = vmul.f32 1.0, %v872
    %v874 = vrcp.pop %v854
    %v875 = vmul.f32 1.0, %v874
    %v876 = vrcp.pop %v855
    %v877 = vmul.f32 1.0, %v876
    %v878 = vrcp.pop %v856
    %v879 = vmul.f32 1.0, %v878
    %v880 = vrcp.pop %v857
    %v881 = vmul.f32 1.0, %v880
    %v882 = vtanh.pop %v796
    %v883 = vtanh.pop %v799
    %v884 = vtanh.pop %v804
    %v885 = vtanh.pop %v807
    %s886 = scalar_lea.vmem %s2, 32
    %v887 = vld [vmem:[%s886] sm:$0xff]
    %v888 = vld [vmem:[%s886 + $0x8] sm:$0xff]
    %v889 = vld [vmem:[%s886 + $0x10] sm:$0xff]
    %v890 = vld [vmem:[%s886 + $0x18] sm:$0xff]
    %v891 = vmul.f32 %v859, %v887
    %v892 = vmul.f32 %v861, %v888
    %v893 = vmul.f32 %v863, %v889
    %v894 = vmul.f32 %v865, %v890
    %v895 = vmul.f32 %v867, %v882
    %v896 = vmul.f32 %v869, %v883
    %v897 = vmul.f32 %v871, %v884
    %v898 = vmul.f32 %v873, %v885
    %v899 = vadd.f32 %v891, %v895
    %v900 = vadd.f32 %v892, %v896
    %v901 = vadd.f32 %v893, %v897
    %v902 = vadd.f32 %v894, %v898
    %v903 = vtanh.pop %v899
    %v904 = vtanh.pop %v900
    %v905 = vtanh.pop %v901
    %v906 = vtanh.pop %v902
    %v907 = vmul.f32 %v875, %v903
    %v908 = vmul.f32 %v877, %v904
    %v909 = vmul.f32 %v879, %v905
    %v910 = vmul.f32 %v881, %v906
    %s911 = scalar_lea.vmem [#allocation3], 32
    %912 = vst [vmem:[%s911] sm:$0xff] %v907
    %913 = vst [vmem:[%s911 + $0x8] sm:$0xff] %v908
    %914 = vst [vmem:[%s911 + $0x10] sm:$0xff] %v909
    %915 = vst [vmem:[%s911 + $0x18] sm:$0xff] %v910
    %s916 = scalar_lea.vmem [#allocation5], 32
    %917 = vst [vmem:[%s916] sm:$0xff] %v899
    %918 = vst [vmem:[%s916 + $0x8] sm:$0xff] %v900
    %919 = vst [vmem:[%s916 + $0x10] sm:$0xff] %v901
    %920 = vst [vmem:[%s916 + $0x18] sm:$0xff] %v902
    // Predicated region
    $region26: #{dws_conv_lstm_1d.1} parent=1 // pred_check
      _
    $region27: #{dws_conv_lstm_1d.1} parent=1 // pred_check_branch
      %922 = sbr.rel (0) target = $region29
    $region28: #{dws_conv_lstm_1d.1} parent=1 // pred_region
      %s924 = ssub.s32 1024, 1024
      %925 = vsyncadd [#allocation4], %s924
      %s926 = sshll.u32 [#allocation3], 4
      %s927 = int_to_ptr.vmem [resolvable:$true] %s926
      %932 = dma.vmem_to_hbm [thread:$0]  %s927, 1024, %s6, [#allocation4], 128, 128, 8
    $region29: #{dws_conv_lstm_1d.1} parent=1 // pred_fallthru
      _
    // Predicated region
    $region30: #{dws_conv_lstm_1d.1} parent=1 // pred_check
      _
    $region31: #{dws_conv_lstm_1d.1} parent=1 // pred_check_branch
      %934 = sbr.rel (0) target = $region33
    $region32: #{dws_conv_lstm_1d.1} parent=1 // pred_region
      %s936 = ssub.s32 1024, 1024
      %937 = vsyncadd [#allocation6], %s936
      %s938 = sshll.u32 [#allocation5], 4
      %s939 = int_to_ptr.vmem [resolvable:$true] %s938
      %944 = dma.vmem_to_hbm [thread:$0]  %s939, 1024, %s7, [#allocation6], 128, 128, 8
    $region33: #{dws_conv_lstm_1d.1} parent=1 // pred_fallthru
      _
    // Predicated region
    $region34: #{dws_conv_lstm_1d.1} parent=1 // pred_check
      _
    $region35: #{dws_conv_lstm_1d.1} parent=1 // pred_check_branch
      %946 = sbr.rel (0) target = $region37
    $region36: #{dws_conv_lstm_1d.1} parent=1 // pred_region
      %947 = dma.done [#allocation4], 1024
    $region37: #{dws_conv_lstm_1d.1} parent=1 // pred_fallthru
      _
    // Predicated region
    $region38: #{dws_conv_lstm_1d.1} parent=1 // pred_check
      _
    $region39: #{dws_conv_lstm_1d.1} parent=1 // pred_check_branch
      %949 = sbr.rel (0) target = $region41
    $region40: #{dws_conv_lstm_1d.1} parent=1 // pred_region
      %950 = dma.done [#allocation6], 1024
    $region41: #{dws_conv_lstm_1d.1} parent=1 // pred_fallthru
      _
    %951 = vsyncpa [#allocation4], 1
    %952 = vsyncpa [#allocation6], 1

</llo_original>
